<compile_context>
chip_gen: v5e
topology: v5e:2x2
jax: 0.10.0
libtpu: 0.0.40
codegen_flags: <defaults>
</compile_context>

<pallas_src>
import functools
import math

import jax
import jax.numpy as jnp
from jax import lax
from jax.experimental import pallas as pl
from jax.experimental.pallas import tpu as pltpu


# --------------------------------------------------------------------------- VMEM budget

def _vmem_capacity_bytes():
    """Per-TensorCore VMEM capacity; conservative 64 MiB (v7x) fallback."""
    try:
        cap = int(pltpu.get_tpu_info().vmem_capacity_bytes)
        if (32 << 20) <= cap <= (256 << 20):
            return cap
    except Exception:
        pass
    return 64 << 20


def _vmem_usable_bytes():
    cap = _vmem_capacity_bytes()
    # 48 MiB on a 64 MiB part (v7x), 96 MiB on 128 MiB parts (v5e/v6e).
    return max(32 << 20, min(3 * cap // 4, cap - (8 << 20)))


def _choose_spatial_tile(S, C, itemsize, budget_bytes):
    """Pick the spatial tile ts (lane axis) and the padded spatial extent S_pad.

    ts is a multiple of 128 whose (C, ts) x-block stays under budget_bytes.  If S has a
    reasonably large multiple-of-128 divisor we use it (no padding); otherwise S is
    zero-padded up to a multiple of ts.  This avoids both the old ts=S blow-up and the
    divisor collapse to pathological 128-lane tiles.
    """
    lane = 128
    s_up = -(-S // lane) * lane                            # round_up(S, 128)
    max_ts = (budget_bytes // max(1, C * itemsize)) // lane * lane
    max_ts = max(lane, min(max_ts, s_up))
    if S % lane == 0:
        ts = max_ts
        while ts > lane and S % ts != 0:
            ts -= lane
        if S % ts == 0 and ts >= min(512, max_ts):
            return ts, S                                   # exact tiling, no padding
    ts = max_ts
    return ts, -(-S // ts) * ts


# --------------------------------------------------------------------------- kernels

def _fused_kernel(w_ref, x_ref, o_ref, *, k, inv_count):
    """Single pass: pool over S + k-tap channel conv + sigmoid + broadcast multiply.

    w_ref: SMEM (k,)   centre-column taps of the (k, k) Conv2d weight
    x_ref: (1, C, S)   one batch slab, S on the lane axis
    o_ref: (1, C, S)
    """
    C = x_ref.shape[1]
    p = k // 2
    xf = x_ref[0].astype(jnp.float32)                                     # (C, S)
    mean = jnp.sum(xf, axis=-1, keepdims=True) * jnp.float32(inv_count)   # (C, 1)

    # Banded (C, C) conv matrix built in-register from the k SMEM taps (no O(C^2) HBM):
    #   band[i, j] = w1d[j - i + p] inside the band, 0 outside.
    ii = lax.broadcasted_iota(jnp.int32, (C, C), 0)
    jj = lax.broadcasted_iota(jnp.int32, (C, C), 1)
    d = jj - ii + p
    band = jnp.zeros((C, C), jnp.float32)
    for a in range(k):                                   # k is small & static (1..9)
        band = jnp.where(d == a, w_ref[a], band)

    conv = jnp.dot(band, mean, preferred_element_type=jnp.float32)        # (C, 1)
    # out = x * sigmoid(conv) + x  ==  x * (1 + sigmoid(conv))
    scale = 1.0 + 1.0 / (1.0 + jnp.exp(-conv))
    o_ref[0] = (xf * scale).astype(o_ref.dtype)


def _pool_kernel(x_ref, sum_ref, acc_ref):
    """Two-pass path, pass 1: per-(batch, chunk) partial channel sums.

    x_ref:   (1, C, ts)     spatial tile (S on lanes)
    sum_ref: (1, 1, C, 1)   resident over the innermost reduction axis
    acc_ref: (C, 1)         VMEM scratch accumulator
    """
    s = pl.program_id(2)

    @pl.when(s == 0)
    def _init():
        acc_ref[...] = jnp.zeros_like(acc_ref)

    acc_ref[...] += jnp.sum(x_ref[0].astype(jnp.float32), axis=-1, keepdims=True)

    @pl.when(s == pl.num_programs(2) - 1)
    def _finalize():
        sum_ref[0, 0] = acc_ref[...]


def _apply_kernel(scale_ref, x_ref, o_ref):
    """Two-pass path, pass 2: out = x * (1 + sigmoid(conv(mean))), full-lane stores.

    scale_ref: (1, C, 1);  x_ref / o_ref: (1, C, ts)
    """
    o_ref[...] = (x_ref[...].astype(jnp.float32) * scale_ref[...]).astype(o_ref.dtype)


# --------------------------------------------------------------------------- wrapper

def eca_kernel_size(in_channels, b=1, gamma=2):
    """Matches ChannAT.__init__'s adaptive kernel-size selection."""
    ks = int(abs((math.log(in_channels, 2) + b) / gamma))
    return ks if ks % 2 else ks + 1


def chann_at(x, conveca_weight, *, tile_budget_bytes=None, force_path=None,
             donate_x=False):
    """ChannAT forward:  out = x * sigmoid(conv1d_c(mean_{t,h,w}(x))) + x.

    x:                 float [N, C, T, H, W]  (PyTorch NCDHW layout)
    conveca_weight:    float [1, 1, k, k]     Conv2d(1, 1, k, padding=k//2, bias=False)
    tile_budget_bytes: per-tile VMEM budget override for the two-pass path
    force_path:        None (auto) | "fused" | "two_pass"
    donate_x:          alias x onto the output of the apply pass (only safe when the
                       caller does not reuse x afterwards)
    """
    N, C, T, H, W = x.shape
    S = T * H * W
    k = conveca_weight.shape[-1]
    if k % 2 != 1:
        raise ValueError(f"ChannAT expects an odd conv kernel size, got k={k}")
    p = k // 2
    itemsize = jnp.dtype(x.dtype).itemsize

    # The Conv2d input has width 1, so only the centre column of the (k, k) kernel ever
    # multiplies real data (the rest hits zero padding): exact 1-D taps over c.
    w1d = conveca_weight.reshape(k, k)[:, p].astype(jnp.float32)          # (k,)

    x_r = x.reshape(N, C, S)                                              # lane-dense layout

    usable = _vmem_usable_bytes()
    slab_bytes = C * S * itemsize
    # Fused cost: double-buffered in + out slabs (~4x slab) + in-register band temporaries.
    fused_bytes = 4 * slab_bytes + 4 * C * C * 4 + (2 << 20)
    use_fused = fused_bytes <= usable if force_path is None else force_path == "fused"

    if use_fused:
        # TODO(synk): with N == 1 on v7x this path runs on one TensorCore; the two-pass
        # path (chunked pass 1) can win there despite the extra read.
        out = pl.pallas_call(
            functools.partial(_fused_kernel, k=k, inv_count=1.0 / float(S)),
            out_shape=jax.ShapeDtypeStruct((N, C, S), x.dtype),
            grid=(N,),
            in_specs=[
                pl.BlockSpec(memory_space=pltpu.MemorySpace.SMEM),        # k taps
                pl.BlockSpec((1, C, S), lambda n: (n, 0, 0)),             # x slab
            ],
            out_specs=pl.BlockSpec((1, C, S), lambda n: (n, 0, 0)),
            input_output_aliases={1: 0} if donate_x else {},
            compiler_params=pltpu.CompilerParams(
                dimension_semantics=("parallel",),
                vmem_limit_bytes=usable),
            cost_estimate=pl.CostEstimate(
                flops=int(3 * N * C * S),
                transcendentals=int(N * C),
                bytes_accessed=int(2 * N * C * S * itemsize)),
        )(w1d, x_r)
        return out.reshape(N, C, T, H, W)

    # --------------------------------------------------------------------- two-pass
    if tile_budget_bytes is None:
        tile_budget_bytes = min(8 << 20, usable // 5)     # pass 2 keeps ~4 tiles resident
    ts, S_pad = _choose_spatial_tile(S, C, itemsize, tile_budget_bytes)
    x_p = x_r if S_pad == S else jnp.pad(x_r, ((0, 0), (0, 0), (0, S_pad - S)))
    n_tiles = S_pad // ts

    # Extra "parallel" chunk axis so v7x's two TensorCores both get pass-1 work even when
    # N == 1 (the spatial reduction axis stays innermost / "arbitrary").
    n_chunks = 2 if (N == 1 and n_tiles >= 2 and n_tiles % 2 == 0) else 1
    steps = n_tiles // n_chunks

    # Deep pipelining only if the tile was forced small (exposed DMA latency).
    x_pipe = dict(pipeline_mode=pl.Buffered(3)) if ts <= 256 else {}

    # Pass 1: per-(batch, chunk) partial channel sums (no O(C^2) band anywhere).
    psum = pl.pallas_call(
        _pool_kernel,
        out_shape=jax.ShapeDtypeStruct((N, n_chunks, C, 1), jnp.float32),
        grid=(N, n_chunks, steps),
        in_specs=[pl.BlockSpec((1, C, ts),
                               lambda n, c, s: (n, 0, c * steps + s), **x_pipe)],
        out_specs=pl.BlockSpec((1, 1, C, 1), lambda n, c, s: (n, c, 0, 0)),
        scratch_shapes=[pltpu.VMEM((C, 1), jnp.float32)],
        compiler_params=pltpu.CompilerParams(
            dimension_semantics=("parallel", "parallel", "arbitrary"),
            vmem_limit_bytes=usable),
        cost_estimate=pl.CostEstimate(
            flops=int(N * C * S_pad),
            transcendentals=0,
            bytes_accessed=int(N * C * S_pad * itemsize + N * n_chunks * C * 4)),
    )(x_p)

    # Tiny JAX epilogue (O(N*C*k)): finish the mean, the 1-D channel conv (done exactly
    # like the PyTorch Conv2d on the width-1 map) and the sigmoid; fold the "+x" residual.
    mean = (jnp.sum(psum, axis=1) * (1.0 / float(S))).reshape(N, 1, C, 1)
    conv = lax.conv_general_dilated(
        mean, conveca_weight.astype(jnp.float32), window_strides=(1, 1),
        padding=((p, p), (p, p)), dimension_numbers=("NCHW", "OIHW", "NCHW"),
        precision=lax.Precision.HIGHEST)
    scale = (1.0 + jax.nn.sigmoid(conv)).reshape(N, C, 1)

    # Pass 2: out = x * scale (the residual "+ x" is already folded into scale).
    out = pl.pallas_call(
        _apply_kernel,
        out_shape=jax.ShapeDtypeStruct((N, C, S_pad), x.dtype),
        grid=(N, n_tiles),
        in_specs=[
            pl.BlockSpec((1, C, 1), lambda n, s: (n, 0, 0)),               # scale
            pl.BlockSpec((1, C, ts), lambda n, s: (n, 0, s), **x_pipe),    # x tile
        ],
        out_specs=pl.BlockSpec((1, C, ts), lambda n, s: (n, 0, s)),
        input_output_aliases={1: 0} if donate_x else {},
        compiler_params=pltpu.CompilerParams(
            dimension_semantics=("parallel", "parallel"),
            vmem_limit_bytes=usable),
        cost_estimate=pl.CostEstimate(
            flops=int(N * C * S_pad),
            transcendentals=0,
            bytes_accessed=int(2 * N * C * S_pad * itemsize + N * C * 4)),
    )(scale, x_p)

    if S_pad != S:
        out = out[:, :, :S]
    return out.reshape(N, C, T, H, W)


# --------------------------------------------------------------------------- reference

def chann_at_ref(x, conveca_weight):
    """Pure-JAX reference mirroring the PyTorch forward exactly."""
    N, C, T, H, W = x.shape
    k = conveca_weight.shape[-1]
    p = k // 2
    y = jnp.mean(x, axis=(2, 3, 4)).reshape(N, 1, C, 1)                   # avg_pool + view
    y = lax.conv_general_dilated(
        y, conveca_weight, window_strides=(1, 1), padding=((p, p), (p, p)),
        dimension_numbers=("NCHW", "OIHW", "NCHW"),
        precision=lax.Precision.HIGHEST)
    y = jax.nn.sigmoid(y.reshape(N, C, 1, 1, 1))
    return x * y + x


if __name__ == "__main__":
    key = jax.random.PRNGKey(0)
    kx, kw, kx2 = jax.random.split(key, 3)

    # Small NCDHW video tensor consistent with the module.
    N, C, T, H, W = 2, 8, 8, 16, 16
    k = eca_kernel_size(C)                      # -> 3 for C=8
    x = jax.random.normal(kx, (N, C, T, H, W), jnp.float32)
    # NOTE: the module's default init_zero=True zero-inits this weight (output would be
    # exactly 1.5*x); small random weights are used so the conv path is exercised.
    conveca_weight = jax.random.normal(kw, (1, 1, k, k), jnp.float32) * 0.25

    fwd = jax.jit(chann_at,
                  static_argnames=("tile_budget_bytes", "force_path", "donate_x"))

    def check(y, x_in, w_in, tag):
        jax.block_until_ready(y)
        assert y.shape == x_in.shape, (tag, y.shape, x_in.shape)
        err = float(jnp.max(jnp.abs(y - chann_at_ref(x_in, w_in))))
        assert err < 5e-4, f"{tag}: max abs err vs reference = {err}"

    # 1) auto dispatch (fused single-pass path: slab fits VMEM).
    check(fwd(x, conveca_weight), x, conveca_weight, "fused")

    # 2) forced two-pass path, small tile budget -> multi-step spatial reduction,
    #    with the apply pass aliased onto (a copy of) x.
    check(fwd(x, conveca_weight, force_path="two_pass", tile_budget_bytes=16 * 1024,
              donate_x=True),
          x, conveca_weight, "two_pass")

    # 3) two-pass with N == 1 -> the extra parallel chunk axis is exercised.
    x1 = x[:1]
    check(fwd(x1, conveca_weight, force_path="two_pass", tile_budget_bytes=16 * 1024),
          x1, conveca_weight, "two_pass_chunked")

    # 4) two-pass with S not a multiple of 128 -> padded spatial tiling path.
    xr = jax.random.normal(kx2, (2, 8, 4, 10, 10), jnp.float32)
    check(fwd(xr, conveca_weight, force_path="two_pass"), xr, conveca_weight,
          "two_pass_padded")

    print("KERNEL_OK")
</pallas_src>

<mosaic_0001>
module attributes {stable_mosaic.version = 11 : i64} {
  func.func @_fused_kernel(%arg0: i32, %arg1: memref<3xf32, #tpu.memory_space<smem>>, %arg2: memref<1x8x2048xf32, #tpu.memory_space<vmem>>, %arg3: memref<1x8x2048xf32, #tpu.memory_space<vmem>>) attributes {dimension_semantics = [#tpu.dimension_semantics<parallel>], iteration_bounds = array<i64: 2>, scalar_prefetch = 0 : i64, scratch_operands = 0 : i64, tpu.core_type = #tpu.core_type<tc>, window_params = [{transform_indices = @transform_0, window_bounds = array<i64: 3>}, {transform_indices = @transform_1, window_bounds = array<i64: 1, 8, 2048>}, {transform_indices = @transform_2, window_bounds = array<i64: 1, 8, 2048>}]} {
    %c0 = arith.constant 0 : index
    %c0_0 = arith.constant 0 : index
    %c0_1 = arith.constant 0 : index
    %0 = vector.load %arg2[%c0, %c0_0, %c0_1] : memref<1x8x2048xf32, #tpu.memory_space<vmem>>, vector<1x8x2048xf32>
    %1 = vector.shape_cast %0 : vector<1x8x2048xf32> to vector<8x2048xf32>
    %cst = arith.constant dense<0.000000e+00> : vector<8xf32>
    %2 = vector.multi_reduction <add>, %1, %cst [1] : vector<8x2048xf32> to vector<8xf32>
    %3 = vector.shape_cast %2 : vector<8xf32> to vector<8x1xf32>
    %cst_2 = arith.constant 4.8828125E-4 : f32
    %4 = vector.broadcast %cst_2 : f32 to vector<8x1xf32>
    %5 = arith.mulf %3, %4 : vector<8x1xf32>
    %6 = tpu.iota {dimensions = array<i32: 0>} : vector<8x8xi32>
    %7 = tpu.iota {dimensions = array<i32: 1>} : vector<8x8xi32>
    %8 = arith.subi %7, %6 : vector<8x8xi32>
    %c1_i32 = arith.constant 1 : i32
    %9 = vector.broadcast %c1_i32 : i32 to vector<8x8xi32>
    %10 = arith.addi %8, %9 : vector<8x8xi32>
    %cst_3 = arith.constant 0.000000e+00 : f32
    %11 = vector.broadcast %cst_3 : f32 to vector<8x8xf32>
    %c0_i32 = arith.constant 0 : i32
    %12 = vector.broadcast %c0_i32 : i32 to vector<8x8xi32>
    %13 = arith.cmpi eq, %10, %12 : vector<8x8xi32>
    %c0_4 = arith.constant 0 : index
    %14 = memref.load %arg1[%c0_4] : memref<3xf32, #tpu.memory_space<smem>>
    %15 = vector.broadcast %14 : f32 to vector<8x8xf32>
    %16 = arith.select %13, %15, %11 : vector<8x8xi1>, vector<8x8xf32>
    %c1_i32_5 = arith.constant 1 : i32
    %17 = vector.broadcast %c1_i32_5 : i32 to vector<8x8xi32>
    %18 = arith.cmpi eq, %10, %17 : vector<8x8xi32>
    %c1 = arith.constant 1 : index
    %19 = memref.load %arg1[%c1] : memref<3xf32, #tpu.memory_space<smem>>
    %20 = vector.broadcast %19 : f32 to vector<8x8xf32>
    %21 = arith.select %18, %20, %16 : vector<8x8xi1>, vector<8x8xf32>
    %c2_i32 = arith.constant 2 : i32
    %22 = vector.broadcast %c2_i32 : i32 to vector<8x8xi32>
    %23 = arith.cmpi eq, %10, %22 : vector<8x8xi32>
    %c2 = arith.constant 2 : index
    %24 = memref.load %arg1[%c2] : memref<3xf32, #tpu.memory_space<smem>>
    %25 = vector.broadcast %24 : f32 to vector<8x8xf32>
    %26 = arith.select %23, %25, %21 : vector<8x8xi1>, vector<8x8xf32>
    %cst_6 = arith.constant dense<0.000000e+00> : vector<8x1xf32>
    %27 = tpu.matmul %26, %5, %cst_6 {dimension_numbers = #tpu.dot_dimension_numbers<[1], [0], [0], [1], [0, 0, 1, 1], [], []>} : vector<8x8xf32>, vector<8x1xf32>, vector<8x1xf32> -> vector<8x1xf32>
    %cst_7 = arith.constant 0.000000e+00 : f32
    %28 = vector.broadcast %cst_7 : f32 to vector<8x1xf32>
    %29 = arith.subf %28, %27 : vector<8x1xf32>
    %30 = math.exp %29 : vector<8x1xf32>
    %cst_8 = arith.constant 1.000000e+00 : f32
    %31 = vector.broadcast %cst_8 : f32 to vector<8x1xf32>
    %32 = arith.addf %31, %30 : vector<8x1xf32>
    %cst_9 = arith.constant 1.000000e+00 : f32
    %33 = vector.broadcast %cst_9 : f32 to vector<8x1xf32>
    %34 = arith.divf %33, %32 : vector<8x1xf32>
    %cst_10 = arith.constant 1.000000e+00 : f32
    %35 = vector.broadcast %cst_10 : f32 to vector<8x1xf32>
    %36 = arith.addf %35, %34 : vector<8x1xf32>
    %37 = vector.broadcast %36 : vector<8x1xf32> to vector<8x2048xf32>
    %38 = arith.mulf %1, %37 : vector<8x2048xf32>
    %c0_11 = arith.constant 0 : index
    %c0_12 = arith.constant 0 : index
    %c0_13 = arith.constant 0 : index
    %39 = vector.load %arg3[%c0_11, %c0_12, %c0_13] : memref<1x8x2048xf32, #tpu.memory_space<vmem>>, vector<1x8x2048xf32>
    %40 = vector.shape_cast %39 : vector<1x8x2048xf32> to vector<8x2048xf32>
    %41 = vector.shape_cast %38 : vector<8x2048xf32> to vector<1x8x2048xf32>
    tpu.vector_store %arg3[%c0_11, %c0_12, %c0_13], %41 {strides = array<i32>} : memref<1x8x2048xf32, #tpu.memory_space<vmem>>, vector<1x8x2048xf32>,
    return
  }
  func.func @transform_0(%arg0: i32) -> i32 {
    %c0_i32 = arith.constant 0 : i32
    %c0_i32_0 = arith.constant 0 : i32
    return %c0_i32 : i32
  }
  func.func @transform_1(%arg0: i32) -> (i32, i32, i32) {
    %c0_i32 = arith.constant 0 : i32
    %c0_i32_0 = arith.constant 0 : i32
    %c0_i32_1 = arith.constant 0 : i32
    return %arg0, %c0_i32, %c0_i32_0 : i32, i32, i32
  }
  func.func @transform_2(%arg0: i32) -> (i32, i32, i32) {
    %c0_i32 = arith.constant 0 : i32
    %c0_i32_0 = arith.constant 0 : i32
    %c0_i32_1 = arith.constant 0 : i32
    return %arg0, %c0_i32, %c0_i32_0 : i32, i32, i32
  }
}

</mosaic_0001>

<llo_original>
// kernel: chann_at.1
$region0: #{chann_at.1}
  #allocation0 [shape = 'u32[]', space=smem, size = 0x4, offset = 0x4, fixed_abs, tag = 'smem constant byte address 0x4 - core index']
  #allocation1 [shape = 'u32[72,128]{1,0:T(1,128)}', space=vmem, size = 0x9000, scoped, tag = 'internal scratch']
  %s0 = inlined_call_operand.vmem [shape: f32[3], index: 0, kind: input, shape index: {}]
  %s1 = inlined_call_operand.vmem [shape: f32[2,8,2048], index: 1, kind: input, shape index: {}]
  %s2 = inlined_call_operand.vmem [shape: f32[2,8,2048], index: 2, kind: output, shape index: {}]
  %s3 = sld [smem:[#allocation0]]
  $region45: #{chann_at.1} parent=0
    _
  %s5 = ssub.s32 1, %s3
  %s6 = scalar_select 0, %s5, %s3
  $region1: #{chann_at.1} parent=0
    #allocation2 [shape = 'u8[512]{0}', space=smem, size = 0x200, scoped, tag = 'input window, operand 0, single buffered']
    #allocation3 [shape = 's32[2]{0}', space=sflag, size = 0x8, scoped, tag = 'scoped memory for chann_at.1']
    %7 = vsyncpa [#allocation3], 0
    loop: start=0, step=1, limit=4
    $region2: #{chann_at.1} parent=1 // loop_pre_header
      _
    $region3: #{chann_at.1} parent=1 // loop_header
      %s9 = sphi 0, %s13
      %p10 = scmp.ge.s32.totalorder %s9, 4
      %s17 = sphi 0, %s17
      %s19 = sphi 0, %s17
      %s20 = sphi 0, %s19
      %s34 = sphi 0, %s20
      %s40 = sphi 0, %s42
      %s43 = sphi 0, %s40
      %s44 = sphi 0, %s43
      %s60 = sphi 0, %s44
      %s66 = sphi 0, %s68
      %s69 = sphi 0, %s66
      %s70 = sphi 0, %s69
      %s86 = sphi 0, %s70
    $region4: #{chann_at.1} parent=1 // loop_header_branch
      %12 = sbr.rel (%p10) target = $region8
    $region5: #{chann_at.1} parent=1 // loop_body
      %s14 = ssub.s32 %s9, 1
      %s15 = ssub.s32 %s9, 2
      %s16 = sadd.s32 %s9, 1
      %s18 = sadd.s32 %s17, 1
      %p21 = scmp.eq.s32.totalorder %s9, 1
      %p22 = scmp.ne.s32.totalorder %s17, %s19
      %p23 = scmp.eq.s32.totalorder %s9, 0
      %p24 = por %p22, %p23
      %p25 = scmp.ne.s32.totalorder %s17, %s19
      %p26 = scmp.eq.s32.totalorder %s14, 1
      %p27 = por %p25, %p26
      %p28 = scmp.ne.s32.totalorder %s19, %s20
      %p29 = scmp.eq.s32.totalorder %s14, 0
      %p30 = por %p28, %p29
      %p31 = scmp.ne.s32.totalorder %s19, %s20
      %p32 = scmp.eq.s32.totalorder %s15, 1
      %p33 = por %p31, %p32
      %p35 = scmp.ne.s32.totalorder %s20, %s34
      %p36 = scmp.eq.s32.totalorder %s15, 0
      %p37 = por %p35, %p36
      %s38 = ssub.s32 %s9, %s16
      %p39 = scmp.eq.s32.totalorder %s38, 0
      %s41 = sadd.s32 %s40, 1
      %s42 = scalar_select %p39, %s40, %s41
      %p45 = pneg %p39
      %p46 = scmp.eq.s32.totalorder %s9, 1
      %p47 = por %p45, %p46
      %p48 = scmp.ne.s32.totalorder %s40, %s43
      %p49 = scmp.eq.s32.totalorder %s9, 0
      %p50 = por %p48, %p49
      %p51 = scmp.ne.s32.totalorder %s40, %s43
      %p52 = scmp.eq.s32.totalorder %s14, 1
      %p53 = por %p51, %p52
      %p54 = scmp.ne.s32.totalorder %s43, %s44
      %p55 = scmp.eq.s32.totalorder %s14, 0
      %p56 = por %p54, %p55
      %p57 = scmp.ne.s32.totalorder %s43, %s44
      %p58 = scmp.eq.s32.totalorder %s15, 1
      %p59 = por %p57, %p58
      %p61 = scmp.ne.s32.totalorder %s44, %s60
      %p62 = scmp.eq.s32.totalorder %s15, 0
      %p63 = por %p61, %p62
      %s64 = ssub.s32 %s9, %s16
      %p65 = scmp.eq.s32.totalorder %s64, 0
      %s67 = sadd.s32 %s66, 1
      %s68 = scalar_select %p65, %s66, %s67
      %p71 = pneg %p65
      %p72 = scmp.eq.s32.totalorder %s9, 1
      %p73 = por %p71, %p72
      %p74 = scmp.ne.s32.totalorder %s66, %s69
      %p75 = scmp.eq.s32.totalorder %s9, 0
      %p76 = por %p74, %p75
      %p77 = scmp.ne.s32.totalorder %s66, %s69
      %p78 = scmp.eq.s32.totalorder %s14, 1
      %p79 = por %p77, %p78
      %p80 = scmp.ne.s32.totalorder %s69, %s70
      %p81 = scmp.eq.s32.totalorder %s14, 0
      %p82 = por %p80, %p81
      %p83 = scmp.ne.s32.totalorder %s69, %s70
      %p84 = scmp.eq.s32.totalorder %s15, 1
      %p85 = por %p83, %p84
      %p87 = scmp.ne.s32.totalorder %s70, %s86
      %p88 = scmp.eq.s32.totalorder %s15, 0
      %p89 = por %p87, %p88
      %p90 = scmp.le.s32.totalorder 1, %s9
      %p91 = scmp.lt.s32.totalorder %s9, 3
      %p92 = pnand %p90, %p91
      %p93 = pneg %p92
      // Predicated region
      $region9: #{chann_at.1} parent=5 // pred_check
        _
      $region10: #{chann_at.1} parent=5 // pred_check_branch
        %95 = sbr.rel (%p92) target = $region12
      $region11: #{chann_at.1} parent=5 // pred_region
        %s96 = ssub.s32 %s9, 1
        // Predicated region
        $region13: #{chann_at.1} parent=11 // pred_check
          %p97 = pneg %p30
        $region14: #{chann_at.1} parent=11 // pred_check_branch
          %99 = sbr.rel (%p97) target = $region16
        $region15: #{chann_at.1} parent=11 // pred_region
          %101 = vsyncadd [#allocation3], 0
          %s103 = sshll.u32 %s0, 4
          %s104 = int_to_ptr.vmem [resolvable:$true] %s103
          %106 = dma.vmem_to_smem %s104, 16, [#allocation2], [#allocation3]
        $region16: #{chann_at.1} parent=11 // pred_fallthru
          _
      $region12: #{chann_at.1} parent=5 // pred_fallthru
        _
      %p107 = scmp.lt.s32.totalorder %s9, 2
      // Predicated region
      $region17: #{chann_at.1} parent=5 // pred_check
        %p108 = pneg %p107
      $region18: #{chann_at.1} parent=5 // pred_check_branch
        %110 = sbr.rel (%p108) target = $region20
      $region19: #{chann_at.1} parent=5 // pred_region
        // Predicated region
        $region21: #{chann_at.1} parent=19 // pred_check
          %p111 = pneg %p50
        $region22: #{chann_at.1} parent=19 // pred_check_branch
          %113 = sbr.rel (%p111) target = $region24
        $region23: #{chann_at.1} parent=19 // pred_region
          %p114 = scmp.lt.s32.totalorder %s9, 1
          %s115 = scalar_select %p114, %s9, 1
          %s116 = smul.addr %s115, 16
          %s117 = smul.addr %s116, 8
          %s118 = scalar_lea.vmem %s1, %s117
        $region24: #{chann_at.1} parent=19 // pred_fallthru
          _
      $region20: #{chann_at.1} parent=5 // pred_fallthru
        _
      %p119 = scmp.le.s32.totalorder 1, %s9
      %p120 = scmp.lt.s32.totalorder %s9, 3
      %p121 = pnand %p119, %p120
      %p122 = pneg %p121
      // Predicated region
      $region25: #{chann_at.1} parent=5 // pred_check
        _
      $region26: #{chann_at.1} parent=5 // pred_check_branch
        %124 = sbr.rel (%p121) target = $region28
      $region27: #{chann_at.1} parent=5 // pred_region
        %s125 = ssub.s32 %s9, 1
        // Predicated region
        $region29: #{chann_at.1} parent=27 // pred_check
          %p126 = pneg %p30
        $region30: #{chann_at.1} parent=27 // pred_check_branch
          %128 = sbr.rel (%p126) target = $region32
        $region31: #{chann_at.1} parent=27 // pred_region
          %130 = dma.done [#allocation3], 16
        $region32: #{chann_at.1} parent=27 // pred_fallthru
          _
        %131 = sfence
        %p132 = pneg %p30
        %p133 = pneg %p27
        %p134 = scmp.lt.s32.totalorder %s14, 1
        %s135 = scalar_select %p134, %s14, 1
        %s136 = smul.addr %s135, 16
        %s137 = smul.addr %s136, 8
        %s138 = scalar_lea.vmem %s1, %s137
        %p139 = pneg %p56
        %p140 = pneg %p53
        %p141 = pneg %p82
        %p142 = pneg %p79
        %p143 = scmp.lt.s32.totalorder %s14, 1
        %s144 = scalar_select %p143, %s14, 1
        %s145 = smul.addr %s144, 16
        %s146 = smul.addr %s145, 8
        %s147 = scalar_lea.vmem %s2, %s146
        %p148 = scmp.lt.s32.totalorder %s14, 1
        %s149 = scalar_select %p148, %s14, 1
        %s150 = smul.addr %s149, 16
        %s151 = smul.addr %s150, 8
        %s152 = scalar_lea.vmem %s1, %s151
        %p153 = scmp.lt.s32.totalorder %s14, 1
        %s154 = scalar_select %p153, %s14, 1
        %s155 = smul.addr %s154, 16
        %s156 = smul.addr %s155, 8
        %s157 = scalar_lea.vmem %s2, %s156
        %v158 = vld [vmem:[%s152] sm:$0xff]
        %v159 = vld [vmem:[%s152 + $0x8] sm:$0xff]
        %v160 = vld [vmem:[%s152 + $0x10] sm:$0xff]
        %v161 = vld [vmem:[%s152 + $0x18] sm:$0xff]
        %v162 = vld [vmem:[%s152 + $0x20] sm:$0xff]
        %v163 = vld [vmem:[%s152 + $0x28] sm:$0xff]
        %v164 = vld [vmem:[%s152 + $0x30] sm:$0xff]
        %v165 = vld [vmem:[%s152 + $0x38] sm:$0xff]
        %v166 = vld [vmem:[%s152 + $0x40] sm:$0xff]
        %v167 = vld [vmem:[%s152 + $0x48] sm:$0xff]
        %v168 = vld [vmem:[%s152 + $0x50] sm:$0xff]
        %v169 = vld [vmem:[%s152 + $0x58] sm:$0xff]
        %v170 = vld [vmem:[%s152 + $0x60] sm:$0xff]
        %v171 = vld [vmem:[%s152 + $0x68] sm:$0xff]
        %v172 = vld [vmem:[%s152 + $0x70] sm:$0xff]
        %v173 = vld [vmem:[%s152 + $0x78] sm:$0xff]
        %v174 = vadd.f32 %v158, %v159
        %v175 = vadd.f32 %v174, %v160
        %v176 = vadd.f32 %v175, %v161
        %v177 = vadd.f32 %v176, %v162
        %v178 = vadd.f32 %v177, %v163
        %v179 = vadd.f32 %v178, %v164
        %v180 = vadd.f32 %v179, %v165
        %v181 = vadd.f32 %v180, %v166
        %v182 = vadd.f32 %v181, %v167
        %v183 = vadd.f32 %v182, %v168
        %v184 = vadd.f32 %v183, %v169
        %v185 = vadd.f32 %v184, %v170
        %v186 = vadd.f32 %v185, %v171
        %v187 = vadd.f32 %v186, %v172
        %v188 = vadd.f32 %v187, %v173
        %189 = vadd.xlane.f32.xlu0 %v188
        %v190 = vpop.xlane.xlu0 %189
        %v191 = vmul.f32 %v190, 0.00048828125
        %v192 = vlaneseq
        %v193 = vshrl.u32 %v192, 7
        %v194 = vlaneseq
        %v195 = vand.u32 %v194, 127
        %v196 = vsub.s32 %v195, %v193
        %v197 = vadd.s32 %v196, 1
        %vm198 = vcmp.eq.s32.totalorder %v197, 0
        %s199 = sld [smem:[#allocation2]]
        %v200 = vstv %s199
        %v201 = vsel %vm198, %v200, 0.0
        %vm202 = vcmp.eq.s32.totalorder %v197, 1
        %s203 = sld [smem:[#allocation2 + $0x1]]
        %v204 = vstv %s203
        %v205 = vsel %vm202, %v204, %v201
        %vm206 = vcmp.eq.s32.totalorder %v197, 2
        %s207 = sld [smem:[#allocation2 + $0x2]]
        %v208 = vstv %s207
        %v209 = vsel %vm206, %v208, %v205
        %vm210 = vcmask 64512
        %v212 = vsel %vm210, %v209, 0
        %214 = vmatpush.msra.mxu0 0.0
        %215 = vmatpush.msra.mxu0 0.0
        %216 = vmatpush.msra.mxu0 0.0
        %217 = vmatpush.msra.mxu0 0.0
        %218 = vmatpush.msra.mxu0 0.0
        %219 = vmatpush.msra.mxu0 0.0
        %220 = vmatpush.msra.mxu0 0.0
        %221 = vmatpush.msra.mxu0 0.0
        %222 = vmatpush.msra.mxu0 0.0
        %223 = vmatpush.msra.mxu0 0.0
        %224 = vmatpush.msra.mxu0 0.0
        %225 = vmatpush.msra.mxu0 0.0
        %226 = vmatpush.msra.mxu0 0.0
        %227 = vmatpush.msra.mxu0 0.0
        %228 = vmatpush.msra.mxu0 0.0
        %229 = vmatpush.msra.mxu0 %v191
        %230 = vmatmul.f32.gmra.mxu0 %v212
        %v231 = vpop.f32.mrf.mxu0
        %v232 = vadd.f32 0.0, %v231
        %233 = vdwg.mxu0
        %v234 = vsub.f32 0.0, %v232
        %v235 = vmul.f32 %v234, 1.442695
        %v236 = vpow.pop %v235
        %v237 = vadd.f32 %v236, 1.0
        %v238 = vrcp.pop %v237
        %v239 = vmul.f32 %v237, %v238
        %v240 = vsub.f32 1.0, %v239
        %v241 = vmul.f32 %v238, %v240
        %v242 = vadd.f32 %v238, %v241
        %vm243 = vweird.f32 %v237
        %vm244 = vweird.f32 %v238
        %vm245 = vmor %vm243, %vm244
        %v246 = vsel %vm245, %v238, %v242
        %v247 = vand.u32 2147483647, %v237
        %vm248 = vcmp.eq.f32.partialorder %v247, 8.507059e+37
        %v249 = vand.u32 %v237, 2147483648
        %v250 = vor.u32 1.1754944e-38, %v249
        %v251 = vsel %vm248, %v250, %v246
        %v252 = vmul.f32 1.0, %v251
        %v253 = vadd.f32 %v252, 1.0
        %255 = vset.pattern.permute.xlu0 0
        %256 = vperm.xlu0 %255, %v253
        %v257 = vpop.permute.xlu0 %256
        %v259 = vmul.f32 %v158, %v257
        %v260 = vmul.f32 %v159, %v257
        %v261 = vmul.f32 %v160, %v257
        %v262 = vmul.f32 %v161, %v257
        %v263 = vmul.f32 %v162, %v257
        %v264 = vmul.f32 %v163, %v257
        %v265 = vmul.f32 %v164, %v257
        %v266 = vmul.f32 %v165, %v257
        %v267 = vmul.f32 %v166, %v257
        %v268 = vmul.f32 %v167, %v257
        %v269 = vmul.f32 %v168, %v257
        %v270 = vmul.f32 %v169, %v257
        %v271 = vmul.f32 %v170, %v257
        %v272 = vmul.f32 %v171, %v257
        %v273 = vmul.f32 %v172, %v257
        %v274 = vmul.f32 %v173, %v257
        %275 = vst [vmem:[%s157] sm:$0xff] %v259
        %276 = vst [vmem:[%s157 + $0x8] sm:$0xff] %v260
        %277 = vst [vmem:[%s157 + $0x10] sm:$0xff] %v261
        %278 = vst [vmem:[%s157 + $0x18] sm:$0xff] %v262
        %279 = vst [vmem:[%s157 + $0x20] sm:$0xff] %v263
        %280 = vst [vmem:[%s157 + $0x28] sm:$0xff] %v264
        %281 = vst [vmem:[%s157 + $0x30] sm:$0xff] %v265
        %282 = vst [vmem:[%s157 + $0x38] sm:$0xff] %v266
        %283 = vst [vmem:[%s157 + $0x40] sm:$0xff] %v267
        %284 = vst [vmem:[%s157 + $0x48] sm:$0xff] %v268
        %285 = vst [vmem:[%s157 + $0x50] sm:$0xff] %v269
        %286 = vst [vmem:[%s157 + $0x58] sm:$0xff] %v270
        %287 = vst [vmem:[%s157 + $0x60] sm:$0xff] %v271
        %288 = vst [vmem:[%s157 + $0x68] sm:$0xff] %v272
        %289 = vst [vmem:[%s157 + $0x70] sm:$0xff] %v273
        %290 = vst [vmem:[%s157 + $0x78] sm:$0xff] %v274
        %p291 = scmp.lt.s32.totalorder %s14, 1
        %s292 = scalar_select %p291, %s14, 1
        %s293 = smul.addr %s292, 16
        %s294 = smul.addr %s293, 8
        %s295 = scalar_lea.vmem %s2, %s294
        // Predicated region
        $region33: #{chann_at.1} parent=27 // pred_check
          %p296 = pneg %p79
        $region34: #{chann_at.1} parent=27 // pred_check_branch
          %298 = sbr.rel (%p296) target = $region36
        $region35: #{chann_at.1} parent=27 // pred_region
          _
        $region36: #{chann_at.1} parent=27 // pred_fallthru
          _
      $region28: #{chann_at.1} parent=5 // pred_fallthru
        _
      %p299 = scmp.le.s32.totalorder 2, %s9
      // Predicated region
      $region37: #{chann_at.1} parent=5 // pred_check
        %p300 = pneg %p299
      $region38: #{chann_at.1} parent=5 // pred_check_branch
        %302 = sbr.rel (%p300) target = $region40
      $region39: #{chann_at.1} parent=5 // pred_region
        %s303 = ssub.s32 %s9, 2
        // Predicated region
        $region41: #{chann_at.1} parent=39 // pred_check
          %p304 = pneg %p85
        $region42: #{chann_at.1} parent=39 // pred_check_branch
          %306 = sbr.rel (%p304) target = $region44
        $region43: #{chann_at.1} parent=39 // pred_region
          %p307 = scmp.lt.s32.totalorder %s15, 1
          %s308 = scalar_select %p307, %s15, 1
          %s309 = smul.addr %s308, 16
          %s310 = smul.addr %s309, 8
          %s311 = scalar_lea.vmem %s2, %s310
        $region44: #{chann_at.1} parent=39 // pred_fallthru
          _
      $region40: #{chann_at.1} parent=5 // pred_fallthru
        _
    $region6: #{chann_at.1} parent=1 // loop_footer
      %s13 = sadd.s32 1, %s9
    $region7: #{chann_at.1} parent=1 // loop_footer_branch
      %8 = sbr.rel target = $region3
    $region8: #{chann_at.1} parent=1 // loop_exit
      _
    %312 = vsyncpa [#allocation3], 1
    %s313 = scalar_lea.sflag [#allocation3], 1
    %314 = vsyncpa %s313, 1

</llo_original>
